<compile_context>
chip_gen: v6e
topology: v6e:2x2x1
jax: 0.10.0
libtpu: 0.0.40
codegen_flags: <defaults>
</compile_context>

<pallas_src>
import functools

import jax
import jax.numpy as jnp
from jax import lax
from jax.experimental import pallas as pl
from jax.experimental.pallas import tpu as pltpu


def _round_up(x, m):
    return (x + m - 1) // m * m


def _cdiv(a, b):
    return (a + b - 1) // b


# ----------------------------------------------------------------------------
# Fused kernel: Chebyshev expansion (VMEM-resident slab) + graph conv.
# ----------------------------------------------------------------------------
def _agcn_kernel(sup_ref, x_ref, w_ref, b_ref, y_ref, last_ref,
                 cheb_ref, g_ref, *, num_sup, cheb_k, num_mats, dim_in, tb,
                 n_pad):
    cdt = cheb_ref.dtype
    k_per_sup = num_mats // num_sup

    # ---- Phase 1 (first step of the sequential batch axis, once per core):
    # build the Chebyshev slab cheb[(i, n), m] = T_i[n, m] in VMEM scratch.
    @pl.when(pl.program_id(1) == 0)
    def _build_support_set():
        row = lax.broadcasted_iota(jnp.int32, (n_pad, n_pad), 0)
        col = lax.broadcasted_iota(jnp.int32, (n_pad, n_pad), 1)
        eye = (row == col).astype(jnp.float32)
        for s in range(num_sup):
            base = s * k_per_sup
            s_f32 = sup_ref[s].astype(jnp.float32)
            s_c = s_f32.astype(cdt)            # cast hoisted out of the k loop
            # torch always emits [I, S] per support (even for cheb_k < 2).
            cheb_ref[base * n_pad:(base + 1) * n_pad, :] = eye.astype(cdt)
            cheb_ref[(base + 1) * n_pad:(base + 2) * n_pad, :] = s_c
            t_prev, t_cur = eye, s_f32          # recursion carry kept in f32
            for k in range(2, cheb_k):
                t_next = 2.0 * jnp.dot(s_c, t_cur.astype(cdt),
                                       preferred_element_type=jnp.float32) - t_prev
                cheb_ref[(base + k) * n_pad:(base + k + 1) * n_pad, :] = (
                    t_next.astype(cdt))
                t_prev, t_cur = t_cur, t_next
            if s == num_sup - 1:
                # Second output: last Chebyshev polynomial of the last support.
                last_ref[0] = t_cur.astype(last_ref.dtype)

    # ---- Phase 2(a): ONE wide matmul for the whole batch tile.
    #   G[(i, n), (t, c)] = sum_m T_i[n, m] * x[t, m, c]
    # Output width = tb*dim_in lanes, single full-width store (no vst.msk).
    g = jnp.dot(cheb_ref[...], x_ref[0], preferred_element_type=jnp.float32)
    g_ref[...] = g.astype(cdt)

    # ---- Phase 2(b): per batch row, gather the concat-K slab from g_ref with
    # loads only, project with a single K = num_mats*dim_in matmul, add bias,
    # and stream straight to the lane-dense (c_out_pad) output block.
    bvec = b_ref[...]                           # (1, c_out_pad) f32, hoisted
    for t in range(tb):                         # tb is capped small (<= 32)
        xg_t = jnp.concatenate(
            [g_ref[i * n_pad:(i + 1) * n_pad, t * dim_in:(t + 1) * dim_in]
             for i in range(num_mats)], axis=1)            # (n_pad, M*C_in)
        y_t = jnp.dot(xg_t, w_ref[...], preferred_element_type=jnp.float32)
        y_ref[t] = (y_t + bvec).astype(y_ref.dtype)


# ----------------------------------------------------------------------------
# Wrapper: padding / tiling / VMEM budgeting, then slice the padding back off.
# ----------------------------------------------------------------------------
def agcn_forward(x, supports, weights, bias, cheb_k, *, batch_tile=None,
                 compute_dtype=None, core_split=None):
    """x: [B,N,C_in], supports: [num_sup,N,N], weights: [M*C_in,C_out], bias: [C_out].

    Returns (x_gconv [B,N,C_out], last_support [N,N]).
    Weight rows must follow the torch concat order [sup0: I,S,T2..; sup1: ...].
    """
    B, N, dim_in = x.shape
    num_sup = supports.shape[0]
    k_per_sup = max(2, cheb_k)                 # torch always emits at least [I, S]
    num_mats = num_sup * k_per_sup
    dim_out = weights.shape[1]
    k_rows = num_mats * dim_in
    assert weights.shape[0] == k_rows, (
        f"weights rows must equal num_sup*max(2,cheb_k)*dim_in = {k_rows} "
        f"(torch concat order), got {weights.shape[0]}")

    out_dtype = x.dtype
    if compute_dtype is None:
        # MXU-native operand dtype on v5e/v6e/v7x; accumulation stays f32.
        compute_dtype = jnp.bfloat16
    compute_dtype = jnp.dtype(compute_dtype)

    isz = compute_dtype.itemsize
    osz = jnp.dtype(out_dtype).itemsize
    lsz = jnp.dtype(supports.dtype).itemsize

    # Sublane-tile-aligned node padding (f32 -> 8, bf16 -> 16) so the per-i
    # row slices of the cheb / G slabs stay tile-aligned; lane-dense output.
    sub_mult = 8 * max(1, 4 // isz)
    n_pad = _round_up(N, sub_mult)
    c_out_pad = _round_up(dim_out, 128)

    # Generation-aware VMEM budget (~75% of physical capacity).
    try:
        vmem_cap = int(pltpu.get_tpu_info().vmem_capacity_bytes)
    except Exception:  # older jax / non-TPU backend: conservative fallback
        vmem_cap = 64 * 1024 * 1024
    budget = int(0.75 * vmem_cap)

    def vmem_estimate(tb_):
        return (2 * num_sup * n_pad * n_pad * isz           # supports block (x2 bufs)
                + 2 * n_pad * tb_ * dim_in * isz            # x tile
                + 2 * k_rows * c_out_pad * isz              # weights
                + 2 * c_out_pad * 4                         # bias
                + 2 * tb_ * n_pad * c_out_pad * osz         # y tile
                + 2 * n_pad * n_pad * lsz                   # last-support output
                + num_mats * n_pad * n_pad * isz            # cheb scratch
                + num_mats * n_pad * tb_ * dim_in * isz     # G scratch
                + num_mats * n_pad * tb_ * dim_in * 4)      # f32 matmul result temp

    if batch_tile is None:
        # Aim for a stage-A output width of >= 256 lanes, capped so the
        # statically unrolled per-row loop stays small; shrink to fit VMEM.
        tb = max(1, min(32, _cdiv(256, dim_in)))
        tb = min(tb, B)
        while tb > 1 and vmem_estimate(tb) > budget:
            tb //= 2
    else:
        tb = max(1, batch_tile)

    steps = _cdiv(B, tb)
    if core_split is None:
        # v7x has 2 TensorCores; on 1-TC chips this only costs one redundant
        # Chebyshev rebuild, which is negligible.
        core_split = 2 if steps >= 2 else 1
    steps_per_core = _cdiv(steps, core_split)
    total_steps = core_split * steps_per_core
    b_pad = total_steps * tb

    est = vmem_estimate(tb)
    vmem_limit = max(32 * 1024 * 1024, min(2 * est, budget))
    if est > vmem_limit:                        # never request below actual need
        vmem_limit = min(int(1.25 * est), int(0.95 * vmem_cap))
    vmem_limit = int(vmem_limit)

    # ---- Padded / casted operands (skipped when already aligned). ----------
    if supports.shape != (num_sup, n_pad, n_pad) or supports.dtype != compute_dtype:
        sup_p = jnp.zeros((num_sup, n_pad, n_pad), compute_dtype)
        sup_p = sup_p.at[:, :N, :N].set(supports.astype(compute_dtype))
    else:
        sup_p = supports

    if x.shape != (b_pad, n_pad, dim_in) or x.dtype != compute_dtype:
        x_p = jnp.zeros((b_pad, n_pad, dim_in), compute_dtype)
        x_p = x_p.at[:B, :N, :].set(x.astype(compute_dtype))
    else:
        x_p = x
    # Lane-packed per-step layout (layout plumbing in XLA, not in the kernel):
    #   x_wide[step, m, t*dim_in + c] = x[step*tb + t, m, c]
    x_wide = x_p.reshape(total_steps, tb, n_pad, dim_in).transpose(0, 2, 1, 3)
    x_wide = x_wide.reshape(total_steps, n_pad, tb * dim_in)

    if weights.shape != (k_rows, c_out_pad) or weights.dtype != compute_dtype:
        w_p = jnp.zeros((k_rows, c_out_pad), compute_dtype)
        w_p = w_p.at[:, :dim_out].set(weights.astype(compute_dtype))
    else:
        w_p = weights

    b_p = jnp.zeros((1, c_out_pad), jnp.float32)
    b_p = b_p.at[0, :dim_out].set(bias.astype(jnp.float32))

    kernel = functools.partial(_agcn_kernel, num_sup=num_sup, cheb_k=cheb_k,
                               num_mats=num_mats, dim_in=dim_in, tb=tb,
                               n_pad=n_pad)

    # Note: constant-index blocks (supports / weights / bias) are DMA'd only
    # once (their block index never changes); the cost is just their second
    # pipeline buffer in VMEM, which the budget above accounts for.
    y_p, last_p = pl.pallas_call(
        kernel,
        out_shape=(jax.ShapeDtypeStruct((b_pad, n_pad, c_out_pad), out_dtype),
                   jax.ShapeDtypeStruct((core_split, n_pad, n_pad),
                                        supports.dtype)),
        grid_spec=pltpu.PrefetchScalarGridSpec(
            num_scalar_prefetch=0,
            grid=(core_split, steps_per_core),
            in_specs=[
                pl.BlockSpec((num_sup, n_pad, n_pad), lambda c, b: (0, 0, 0)),
                pl.BlockSpec((1, n_pad, tb * dim_in),
                             lambda c, b: (c * steps_per_core + b, 0, 0)),
                pl.BlockSpec((k_rows, c_out_pad), lambda c, b: (0, 0)),
                pl.BlockSpec((1, c_out_pad), lambda c, b: (0, 0)),
            ],
            out_specs=[
                pl.BlockSpec((tb, n_pad, c_out_pad),
                             lambda c, b: (c * steps_per_core + b, 0, 0)),
                pl.BlockSpec((1, n_pad, n_pad), lambda c, b: (c, 0, 0)),
            ],
            scratch_shapes=[
                pltpu.VMEM((num_mats * n_pad, n_pad), compute_dtype),       # cheb slab
                pltpu.VMEM((num_mats * n_pad, tb * dim_in), compute_dtype),  # G slab
            ],
        ),
        compiler_params=pltpu.CompilerParams(
            # Axis 0 ("parallel"): dual-TC batch split on v7x (each core
            # rebuilds the cheb slab once). Axis 1 ("arbitrary"): sequential,
            # the cheb slab built at step 0 is reused by later steps.
            dimension_semantics=("parallel", "arbitrary"),
            vmem_limit_bytes=vmem_limit,
        ),
    )(sup_p, x_wide, w_p, b_p)

    return y_p[:B, :N, :dim_out].astype(out_dtype), last_p[0, :N, :N]


# ----------------------------------------------------------------------------
# Pure-JAX reference, mirroring the torch forward exactly (HIGHEST precision).
# ----------------------------------------------------------------------------
def agcn_reference(x, supports, weights, bias, cheb_k):
    hp = jax.lax.Precision.HIGHEST
    support_set = []
    for s in supports:
        ks = [jnp.eye(s.shape[0], dtype=s.dtype), s]
        for _ in range(2, cheb_k):
            ks.append(2.0 * jnp.matmul(s, ks[-1], precision=hp) - ks[-2])
        support_set.extend(ks)
    x_g = jnp.concatenate(
        [jnp.einsum('nm,bmc->bnc', s, x, precision=hp) for s in support_set],
        axis=-1)
    out = jnp.einsum('bni,io->bno', x_g, weights, precision=hp) + bias
    return out, support_set[-1]


if __name__ == "__main__":
    B, N, C_in, C_out, cheb_k, num_sup = 2, 8, 4, 16, 3, 2

    key = jax.random.PRNGKey(0)
    k_x, k_s, k_w = jax.random.split(key, 3)

    x = jax.random.normal(k_x, (B, N, C_in), dtype=jnp.float32)

    # Two random row-normalized adjacency-like supports.
    raw = jax.random.uniform(k_s, (num_sup, N, N), dtype=jnp.float32)
    supports = raw / jnp.sum(raw, axis=-1, keepdims=True)

    # xavier_normal_ on [2*cheb_k*dim_in, dim_out]; bias = 0.
    fan_in, fan_out = num_sup * cheb_k * C_in, C_out
    std = (2.0 / (fan_in + fan_out)) ** 0.5
    weights = std * jax.random.normal(k_w, (fan_in, fan_out), dtype=jnp.float32)
    bias = jnp.zeros((C_out,), dtype=jnp.float32)

    ref_out, ref_last = agcn_reference(x, list(supports), weights, bias, cheb_k)

    # f32-operand path (tight check against the f32 reference).
    out32, last32 = agcn_forward(x, supports, weights, bias, cheb_k,
                                 compute_dtype=jnp.float32)
    jax.block_until_ready((out32, last32))
    assert out32.shape == ref_out.shape and last32.shape == ref_last.shape
    assert jnp.allclose(out32, ref_out, atol=1e-2, rtol=1e-2), "gconv mismatch (f32)"
    assert jnp.allclose(last32, ref_last, atol=1e-2, rtol=1e-2), "cheb mismatch (f32)"

    # Default bf16-operand path (MXU-native, f32 accumulation) -> loose check.
    out_bf, last_bf = agcn_forward(x, supports, weights, bias, cheb_k)
    jax.block_until_ready((out_bf, last_bf))
    assert out_bf.shape == ref_out.shape and last_bf.shape == ref_last.shape
    assert jnp.allclose(out_bf, ref_out, atol=1e-1, rtol=1e-1), "gconv mismatch (bf16)"
    assert jnp.allclose(last_bf, ref_last, atol=1e-1, rtol=1e-1), "cheb mismatch (bf16)"

    print("KERNEL_OK")
</pallas_src>

<mosaic_0001>
module attributes {stable_mosaic.version = 11 : i64} {
  func.func @_agcn_kernel(%arg0: i32, %arg1: i32, %arg2: memref<2x8x8xf32, #tpu.memory_space<vmem>>, %arg3: memref<1x8x8xf32, #tpu.memory_space<vmem>>, %arg4: memref<24x128xf32, #tpu.memory_space<vmem>>, %arg5: memref<1x128xf32, #tpu.memory_space<vmem>>, %arg6: memref<2x8x128xf32, #tpu.memory_space<vmem>>, %arg7: memref<1x8x8xf32, #tpu.memory_space<vmem>>, %arg8: memref<48x8xf32, #tpu.memory_space<vmem>>, %arg9: memref<48x8xf32, #tpu.memory_space<vmem>>) attributes {dimension_semantics = [#tpu.dimension_semantics<parallel>, #tpu.dimension_semantics<arbitrary>], iteration_bounds = array<i64: 1, 1>, scalar_prefetch = 0 : i64, scratch_operands = 2 : i64, tpu.core_type = #tpu.core_type<tc>, window_params = [{pipeline_mode = #tpu.pipeline_mode<synchronous>, transform_indices = @transform_0, window_bounds = array<i64: 2, 8, 8>}, {transform_indices = @transform_1, window_bounds = array<i64: 1, 8, 8>}, {pipeline_mode = #tpu.pipeline_mode<synchronous>, transform_indices = @transform_2, window_bounds = array<i64: 24, 128>}, {pipeline_mode = #tpu.pipeline_mode<synchronous>, transform_indices = @transform_3, window_bounds = array<i64: 1, 128>}, {transform_indices = @transform_4, window_bounds = array<i64: 2, 8, 128>}, {transform_indices = @transform_5, window_bounds = array<i64: 1, 8, 8>}]} {
    %c0_i32 = arith.constant 0 : i32
    %0 = arith.cmpi eq, %arg1, %c0_i32 : i32
    %1 = arith.extui %0 : i1 to i32
    %c0_i32_0 = arith.constant 0 : i32
    %2 = arith.cmpi ne, %1, %c0_i32_0 : i32
    scf.if %2 {
      %37 = tpu.iota {dimensions = array<i32: 0>} : vector<8x8xi32>
      %38 = tpu.iota {dimensions = array<i32: 1>} : vector<8x8xi32>
      %39 = arith.cmpi eq, %37, %38 : vector<8x8xi32>
      %40 = arith.extui %39 : vector<8x8xi1> to vector<8x8xi32>
      %41 = arith.sitofp %40 : vector<8x8xi32> to vector<8x8xf32>
      %c0_38 = arith.constant 0 : index
      %c0_39 = arith.constant 0 : index
      %c0_40 = arith.constant 0 : index
      %42 = vector.load %arg2[%c0_38, %c0_39, %c0_40] : memref<2x8x8xf32, #tpu.memory_space<vmem>>, vector<1x8x8xf32>
      %43 = vector.shape_cast %42 : vector<1x8x8xf32> to vector<8x8xf32>
      %c0_41 = arith.constant 0 : index
      %c0_42 = arith.constant 0 : index
      %44 = vector.load %arg8[%c0_41, %c0_42] : memref<48x8xf32, #tpu.memory_space<vmem>>, vector<8x8xf32>
      tpu.vector_store %arg8[%c0_41, %c0_42], %41 {strides = array<i32>} : memref<48x8xf32, #tpu.memory_space<vmem>>, vector<8x8xf32>,
      %c8_43 = arith.constant 8 : index
      %c0_44 = arith.constant 0 : index
      %45 = vector.load %arg8[%c8_43, %c0_44] : memref<48x8xf32, #tpu.memory_space<vmem>>, vector<8x8xf32>
      tpu.vector_store %arg8[%c8_43, %c0_44], %43 {strides = array<i32>} : memref<48x8xf32, #tpu.memory_space<vmem>>, vector<8x8xf32>,
      %cst_45 = arith.constant dense<0.000000e+00> : vector<8x8xf32>
      %46 = tpu.matmul %43, %43, %cst_45 {dimension_numbers = #tpu.dot_dimension_numbers<[1], [0], [0], [1], [0, 0, 1, 1], [], []>} : vector<8x8xf32>, vector<8x8xf32>, vector<8x8xf32> -> vector<8x8xf32>
      %cst_46 = arith.constant 2.000000e+00 : f32
      %47 = vector.broadcast %cst_46 : f32 to vector<8x8xf32>
      %48 = arith.mulf %47, %46 : vector<8x8xf32>
      %49 = arith.subf %48, %41 : vector<8x8xf32>
      %c16_47 = arith.constant 16 : index
      %c0_48 = arith.constant 0 : index
      %50 = vector.load %arg8[%c16_47, %c0_48] : memref<48x8xf32, #tpu.memory_space<vmem>>, vector<8x8xf32>
      tpu.vector_store %arg8[%c16_47, %c0_48], %49 {strides = array<i32>} : memref<48x8xf32, #tpu.memory_space<vmem>>, vector<8x8xf32>,
      %c1_49 = arith.constant 1 : index
      %c0_50 = arith.constant 0 : index
      %c0_51 = arith.constant 0 : index
      %51 = vector.load %arg2[%c1_49, %c0_50, %c0_51] : memref<2x8x8xf32, #tpu.memory_space<vmem>>, vector<1x8x8xf32>
      %52 = vector.shape_cast %51 : vector<1x8x8xf32> to vector<8x8xf32>
      %c24_52 = arith.constant 24 : index
      %c0_53 = arith.constant 0 : index
      %53 = vector.load %arg8[%c24_52, %c0_53] : memref<48x8xf32, #tpu.memory_space<vmem>>, vector<8x8xf32>
      tpu.vector_store %arg8[%c24_52, %c0_53], %41 {strides = array<i32>} : memref<48x8xf32, #tpu.memory_space<vmem>>, vector<8x8xf32>,
      %c32_54 = arith.constant 32 : index
      %c0_55 = arith.constant 0 : index
      %54 = vector.load %arg8[%c32_54, %c0_55] : memref<48x8xf32, #tpu.memory_space<vmem>>, vector<8x8xf32>
      tpu.vector_store %arg8[%c32_54, %c0_55], %52 {strides = array<i32>} : memref<48x8xf32, #tpu.memory_space<vmem>>, vector<8x8xf32>,
      %cst_56 = arith.constant dense<0.000000e+00> : vector<8x8xf32>
      %55 = tpu.matmul %52, %52, %cst_56 {dimension_numbers = #tpu.dot_dimension_numbers<[1], [0], [0], [1], [0, 0, 1, 1], [], []>} : vector<8x8xf32>, vector<8x8xf32>, vector<8x8xf32> -> vector<8x8xf32>
      %cst_57 = arith.constant 2.000000e+00 : f32
      %56 = vector.broadcast %cst_57 : f32 to vector<8x8xf32>
      %57 = arith.mulf %56, %55 : vector<8x8xf32>
      %58 = arith.subf %57, %41 : vector<8x8xf32>
      %c40_58 = arith.constant 40 : index
      %c0_59 = arith.constant 0 : index
      %59 = vector.load %arg8[%c40_58, %c0_59] : memref<48x8xf32, #tpu.memory_space<vmem>>, vector<8x8xf32>
      tpu.vector_store %arg8[%c40_58, %c0_59], %58 {strides = array<i32>} : memref<48x8xf32, #tpu.memory_space<vmem>>, vector<8x8xf32>,
      %c0_60 = arith.constant 0 : index
      %c0_61 = arith.constant 0 : index
      %c0_62 = arith.constant 0 : index
      %60 = vector.load %arg7[%c0_60, %c0_61, %c0_62] : memref<1x8x8xf32, #tpu.memory_space<vmem>>, vector<1x8x8xf32>
      %61 = vector.shape_cast %60 : vector<1x8x8xf32> to vector<8x8xf32>
      %62 = vector.shape_cast %58 : vector<8x8xf32> to vector<1x8x8xf32>
      tpu.vector_store %arg7[%c0_60, %c0_61, %c0_62], %62 {strides = array<i32>} : memref<1x8x8xf32, #tpu.memory_space<vmem>>, vector<1x8x8xf32>,
    } else {
    }
    %c0 = arith.constant 0 : index
    %c0_1 = arith.constant 0 : index
    %3 = vector.load %arg8[%c0, %c0_1] : memref<48x8xf32, #tpu.memory_space<vmem>>, vector<48x8xf32>
    %c0_2 = arith.constant 0 : index
    %c0_3 = arith.constant 0 : index
    %c0_4 = arith.constant 0 : index
    %4 = vector.load %arg3[%c0_2, %c0_3, %c0_4] : memref<1x8x8xf32, #tpu.memory_space<vmem>>, vector<1x8x8xf32>
    %5 = vector.shape_cast %4 : vector<1x8x8xf32> to vector<8x8xf32>
    %cst = arith.constant dense<0.000000e+00> : vector<48x8xf32>
    %6 = tpu.matmul %3, %5, %cst {dimension_numbers = #tpu.dot_dimension_numbers<[1], [0], [0], [1], [0, 0, 1, 1], [], []>} : vector<48x8xf32>, vector<8x8xf32>, vector<48x8xf32> -> vector<48x8xf32>
    %c0_5 = arith.constant 0 : index
    %c0_6 = arith.constant 0 : index
    %7 = vector.load %arg9[%c0_5, %c0_6] : memref<48x8xf32, #tpu.memory_space<vmem>>, vector<48x8xf32>
    tpu.vector_store %arg9[%c0_5, %c0_6], %6 {strides = array<i32>} : memref<48x8xf32, #tpu.memory_space<vmem>>, vector<48x8xf32>,
    %c0_7 = arith.constant 0 : index
    %c0_8 = arith.constant 0 : index
    %8 = vector.load %arg5[%c0_7, %c0_8] : memref<1x128xf32, #tpu.memory_space<vmem>>, vector<1x128xf32>
    %c0_9 = arith.constant 0 : index
    %c0_10 = arith.constant 0 : index
    %9 = vector.load %arg9[%c0_9, %c0_10] : memref<48x8xf32, #tpu.memory_space<vmem>>, vector<8x4xf32>
    %c8 = arith.constant 8 : index
    %c0_11 = arith.constant 0 : index
    %10 = vector.load %arg9[%c8, %c0_11] : memref<48x8xf32, #tpu.memory_space<vmem>>, vector<8x4xf32>
    %c16 = arith.constant 16 : index
    %c0_12 = arith.constant 0 : index
    %11 = vector.load %arg9[%c16, %c0_12] : memref<48x8xf32, #tpu.memory_space<vmem>>, vector<8x4xf32>
    %c24 = arith.constant 24 : index
    %c0_13 = arith.constant 0 : index
    %12 = vector.load %arg9[%c24, %c0_13] : memref<48x8xf32, #tpu.memory_space<vmem>>, vector<8x4xf32>
    %c32 = arith.constant 32 : index
    %c0_14 = arith.constant 0 : index
    %13 = vector.load %arg9[%c32, %c0_14] : memref<48x8xf32, #tpu.memory_space<vmem>>, vector<8x4xf32>
    %c40 = arith.constant 40 : index
    %c0_15 = arith.constant 0 : index
    %14 = vector.load %arg9[%c40, %c0_15] : memref<48x8xf32, #tpu.memory_space<vmem>>, vector<8x4xf32>
    %15 = tpu.concatenate %9, %10, %11, %12, %13, %14 in 1 : vector<8x4xf32>, vector<8x4xf32>, vector<8x4xf32>, vector<8x4xf32>, vector<8x4xf32>, vector<8x4xf32> -> vector<8x24xf32>
    %c0_16 = arith.constant 0 : index
    %c0_17 = arith.constant 0 : index
    %16 = vector.load %arg4[%c0_16, %c0_17] : memref<24x128xf32, #tpu.memory_space<vmem>>, vector<24x128xf32>
    %cst_18 = arith.constant dense<0.000000e+00> : vector<8x128xf32>
    %17 = tpu.matmul %15, %16, %cst_18 {dimension_numbers = #tpu.dot_dimension_numbers<[1], [0], [0], [1], [0, 0, 1, 1], [], []>} : vector<8x24xf32>, vector<24x128xf32>, vector<8x128xf32> -> vector<8x128xf32>
    %18 = vector.broadcast %8 : vector<1x128xf32> to vector<8x128xf32>
    %19 = arith.addf %17, %18 : vector<8x128xf32>
    %c0_19 = arith.constant 0 : index
    %c0_20 = arith.constant 0 : index
    %c0_21 = arith.constant 0 : index
    %20 = vector.load %arg6[%c0_19, %c0_20, %c0_21] : memref<2x8x128xf32, #tpu.memory_space<vmem>>, vector<1x8x128xf32>
    %21 = vector.shape_cast %20 : vector<1x8x128xf32> to vector<8x128xf32>
    %22 = vector.shape_cast %19 : vector<8x128xf32> to vector<1x8x128xf32>
    tpu.vector_store %arg6[%c0_19, %c0_20, %c0_21], %22 {strides = array<i32>} : memref<2x8x128xf32, #tpu.memory_space<vmem>>, vector<1x8x128xf32>,
    %c0_22 = arith.constant 0 : index
    %c4 = arith.constant 4 : index
    %23 = vector.load %arg9[%c0_22, %c4] : memref<48x8xf32, #tpu.memory_space<vmem>>, vector<8x4xf32>
    %c8_23 = arith.constant 8 : index
    %c4_24 = arith.constant 4 : index
    %24 = vector.load %arg9[%c8_23, %c4_24] : memref<48x8xf32, #tpu.memory_space<vmem>>, vector<8x4xf32>
    %c16_25 = arith.constant 16 : index
    %c4_26 = arith.constant 4 : index
    %25 = vector.load %arg9[%c16_25, %c4_26] : memref<48x8xf32, #tpu.memory_space<vmem>>, vector<8x4xf32>
    %c24_27 = arith.constant 24 : index
    %c4_28 = arith.constant 4 : index
    %26 = vector.load %arg9[%c24_27, %c4_28] : memref<48x8xf32, #tpu.memory_space<vmem>>, vector<8x4xf32>
    %c32_29 = arith.constant 32 : index
    %c4_30 = arith.constant 4 : index
    %27 = vector.load %arg9[%c32_29, %c4_30] : memref<48x8xf32, #tpu.memory_space<vmem>>, vector<8x4xf32>
    %c40_31 = arith.constant 40 : index
    %c4_32 = arith.constant 4 : index
    %28 = vector.load %arg9[%c40_31, %c4_32] : memref<48x8xf32, #tpu.memory_space<vmem>>, vector<8x4xf32>
    %29 = tpu.concatenate %23, %24, %25, %26, %27, %28 in 1 : vector<8x4xf32>, vector<8x4xf32>, vector<8x4xf32>, vector<8x4xf32>, vector<8x4xf32>, vector<8x4xf32> -> vector<8x24xf32>
    %c0_33 = arith.constant 0 : index
    %c0_34 = arith.constant 0 : index
    %30 = vector.load %arg4[%c0_33, %c0_34] : memref<24x128xf32, #tpu.memory_space<vmem>>, vector<24x128xf32>
    %cst_35 = arith.constant dense<0.000000e+00> : vector<8x128xf32>
    %31 = tpu.matmul %29, %30, %cst_35 {dimension_numbers = #tpu.dot_dimension_numbers<[1], [0], [0], [1], [0, 0, 1, 1], [], []>} : vector<8x24xf32>, vector<24x128xf32>, vector<8x128xf32> -> vector<8x128xf32>
    %32 = vector.broadcast %8 : vector<1x128xf32> to vector<8x128xf32>
    %33 = arith.addf %31, %32 : vector<8x128xf32>
    %c1 = arith.constant 1 : index
    %c0_36 = arith.constant 0 : index
    %c0_37 = arith.constant 0 : index
    %34 = vector.load %arg6[%c1, %c0_36, %c0_37] : memref<2x8x128xf32, #tpu.memory_space<vmem>>, vector<1x8x128xf32>
    %35 = vector.shape_cast %34 : vector<1x8x128xf32> to vector<8x128xf32>
    %36 = vector.shape_cast %33 : vector<8x128xf32> to vector<1x8x128xf32>
    tpu.vector_store %arg6[%c1, %c0_36, %c0_37], %36 {strides = array<i32>} : memref<2x8x128xf32, #tpu.memory_space<vmem>>, vector<1x8x128xf32>,
    return
  }
  func.func @transform_0(%arg0: i32, %arg1: i32) -> (i32, i32, i32) {
    %c0_i32 = arith.constant 0 : i32
    %c0_i32_0 = arith.constant 0 : i32
    %c0_i32_1 = arith.constant 0 : i32
    %c0_i32_2 = arith.constant 0 : i32
    return %c0_i32, %c0_i32_0, %c0_i32_1 : i32, i32, i32
  }
  func.func @transform_1(%arg0: i32, %arg1: i32) -> (i32, i32, i32) {
    %c1_i32 = arith.constant 1 : i32
    %0 = arith.muli %arg0, %c1_i32 : i32
    %1 = arith.addi %0, %arg1 : i32
    %c0_i32 = arith.constant 0 : i32
    %c0_i32_0 = arith.constant 0 : i32
    %c0_i32_1 = arith.constant 0 : i32
    return %1, %c0_i32, %c0_i32_0 : i32, i32, i32
  }
  func.func @transform_2(%arg0: i32, %arg1: i32) -> (i32, i32) {
    %c0_i32 = arith.constant 0 : i32
    %c0_i32_0 = arith.constant 0 : i32
    %c0_i32_1 = arith.constant 0 : i32
    return %c0_i32, %c0_i32_0 : i32, i32
  }
  func.func @transform_3(%arg0: i32, %arg1: i32) -> (i32, i32) {
    %c0_i32 = arith.constant 0 : i32
    %c0_i32_0 = arith.constant 0 : i32
    %c0_i32_1 = arith.constant 0 : i32
    return %c0_i32, %c0_i32_0 : i32, i32
  }
  func.func @transform_4(%arg0: i32, %arg1: i32) -> (i32, i32, i32) {
    %c1_i32 = arith.constant 1 : i32
    %0 = arith.muli %arg0, %c1_i32 : i32
    %1 = arith.addi %0, %arg1 : i32
    %c0_i32 = arith.constant 0 : i32
    %c0_i32_0 = arith.constant 0 : i32
    %c0_i32_1 = arith.constant 0 : i32
    return %1, %c0_i32, %c0_i32_0 : i32, i32, i32
  }
  func.func @transform_5(%arg0: i32, %arg1: i32) -> (i32, i32, i32) {
    %c0_i32 = arith.constant 0 : i32
    %c0_i32_0 = arith.constant 0 : i32
    %c0_i32_1 = arith.constant 0 : i32
    return %arg0, %c0_i32, %c0_i32_0 : i32, i32, i32
  }
}

</mosaic_0001>

<llo_original>
// kernel: tpu_custom_call.1
$region0: #{tpu_custom_call.1}
  #allocation0 [shape = 'u32[]', space=smem, size = 0x4, offset = 0x4, fixed_abs, tag = 'smem constant byte address 0x4 - core index']
  #allocation1 [shape = 'u32[144,128]{1,0:T(1,128)}', space=vmem, size = 0x12000, scoped, tag = 'internal scratch']
  #allocation2 [shape = 'f32[48,8]{1,0:T(8,128)}', space=vmem, size = 0x6000, scoped, tag = 'scratch operand']
  #allocation3 [shape = 'f32[48,8]{1,0:T(8,128)}', space=vmem, size = 0x6000, scoped, tag = 'scratch operand']
  %s0 = inlined_call_operand.hbm [shape: f32[2,8,8], index: 0, kind: input, shape index: {}]
  %s1 = inlined_call_operand.hbm [shape: f32[1,8,8], index: 1, kind: input, shape index: {}]
  %s2 = inlined_call_operand.hbm [shape: f32[24,128], index: 2, kind: input, shape index: {}]
  %s3 = inlined_call_operand.vmem [shape: f32[1,128], index: 3, kind: input, shape index: {}]
  %s4 = inlined_call_operand.hbm [shape: f32[2,8,128], index: 4, kind: output, shape index: {0}]
  %s5 = inlined_call_operand.hbm [shape: f32[1,8,8], index: 5, kind: output, shape index: {1}]
  %6 = xla_tuple %s4, %s5
  %s7 = sld [smem:[#allocation0]]
  $region50: #{tpu_custom_call.1} parent=0
    _
  %s9 = ssub.s32 1, %s7
  %s10 = scalar_select 0, %s9, %s7
  $region1: #{tpu_custom_call.1} parent=0
    #allocation4 [shape = 'u8[8192]{0}', space=vmem, size = 0x2000, scoped, tag = 'input window, operand 0, single buffered']
    #allocation5 [shape = 's32[1]{0}', space=sflag, size = 0x4, scoped, tag = 'scoped memory for tpu_custom_call.1']
    #allocation6 [shape = 's32[1]{0}', space=sflag, size = 0x4, scoped, tag = 'scoped memory for tpu_custom_call.1']
    #allocation7 [shape = 'u8[4096]{0}', space=vmem, size = 0x1000, scoped, tag = 'input window, operand 1, single buffered']
    #allocation8 [shape = 's32[1]{0}', space=sflag, size = 0x4, scoped, tag = 'scoped memory for tpu_custom_call.1']
    #allocation9 [shape = 'u8[12288]{0}', space=vmem, size = 0x3000, scoped, tag = 'input window, operand 2, single buffered']
    #allocation10 [shape = 'u8[8192]{0}', space=vmem, size = 0x2000, scoped, tag = 'output window, operand 0, single buffered']
    #allocation11 [shape = 'u8[4096]{0}', space=vmem, size = 0x1000, scoped, tag = 'output window, operand 1, single buffered']
    #allocation12 [shape = 's32[1]{0}', space=sflag, size = 0x4, scoped, tag = 'scoped memory for tpu_custom_call.1']
    %11 = vsyncpa [#allocation5], 0
    %12 = vsyncpa [#allocation8], 0
    %13 = vsyncpa [#allocation6], 0
    %14 = vsyncpa [#allocation12], 0
    // Predicated region
    $region2: #{tpu_custom_call.1} parent=1 // pred_check
      _
    $region3: #{tpu_custom_call.1} parent=1 // pred_check_branch
      %16 = sbr.rel (0) target = $region5
    $region4: #{tpu_custom_call.1} parent=1 // pred_region
      %s18 = ssub.s32 256, 256
      %19 = vsyncadd [#allocation5], %s18
      %s20 = sshll.u32 [#allocation4], 4
      %s21 = int_to_ptr.vmem [resolvable:$true] %s20
      %26 = dma.hbm_to_vmem [thread:$0]  %s0, 256, %s21, [#allocation5], 128, 128, 8
    $region5: #{tpu_custom_call.1} parent=1 // pred_fallthru
      _
    // Predicated region
    $region6: #{tpu_custom_call.1} parent=1 // pred_check
      _
    $region7: #{tpu_custom_call.1} parent=1 // pred_check_branch
      %28 = sbr.rel (0) target = $region9
    $region8: #{tpu_custom_call.1} parent=1 // pred_region
      %s29 = sadd.s32 0, 0
      %s31 = ssub.s32 128, 128
      %32 = vsyncadd [#allocation8], %s31
      %s33 = smul.addr %s29, 128
      %s34 = scalar_lea.hbm %s1, %s33
      %s36 = sshll.u32 [#allocation7], 4
      %s37 = int_to_ptr.vmem [resolvable:$true] %s36
      %39 = dma.hbm_to_vmem [thread:$0]  %s34, 128, %s37, [#allocation8]
    $region9: #{tpu_custom_call.1} parent=1 // pred_fallthru
      _
    // Predicated region
    $region10: #{tpu_custom_call.1} parent=1 // pred_check
      _
    $region11: #{tpu_custom_call.1} parent=1 // pred_check_branch
      %41 = sbr.rel (0) target = $region13
    $region12: #{tpu_custom_call.1} parent=1 // pred_region
      %s43 = ssub.s32 384, 384
      %44 = vsyncadd [#allocation8], %s43
      %s45 = sshll.u32 [#allocation9], 4
      %s46 = int_to_ptr.vmem [resolvable:$true] %s45
      %51 = dma.hbm_to_vmem [thread:$0]  %s2, 384, %s46, [#allocation8], 128, 128, 8
    $region13: #{tpu_custom_call.1} parent=1 // pred_fallthru
      _
    // Predicated region
    $region14: #{tpu_custom_call.1} parent=1 // pred_check
      _
    $region15: #{tpu_custom_call.1} parent=1 // pred_check_branch
      %53 = sbr.rel (0) target = $region17
    $region16: #{tpu_custom_call.1} parent=1 // pred_region
      _
    $region17: #{tpu_custom_call.1} parent=1 // pred_fallthru
      _
    // Predicated region
    $region18: #{tpu_custom_call.1} parent=1 // pred_check
      _
    $region19: #{tpu_custom_call.1} parent=1 // pred_check_branch
      %55 = sbr.rel (0) target = $region21
    $region20: #{tpu_custom_call.1} parent=1 // pred_region
      %56 = dma.done [#allocation5], 256
    $region21: #{tpu_custom_call.1} parent=1 // pred_fallthru
      _
    // Predicated region
    $region22: #{tpu_custom_call.1} parent=1 // pred_check
      _
    $region23: #{tpu_custom_call.1} parent=1 // pred_check_branch
      %58 = sbr.rel (0) target = $region25
    $region24: #{tpu_custom_call.1} parent=1 // pred_region
      %59 = dma.done [#allocation8], 128
    $region25: #{tpu_custom_call.1} parent=1 // pred_fallthru
      _
    // Predicated region
    $region26: #{tpu_custom_call.1} parent=1 // pred_check
      _
    $region27: #{tpu_custom_call.1} parent=1 // pred_check_branch
      %61 = sbr.rel (0) target = $region29
    $region28: #{tpu_custom_call.1} parent=1 // pred_region
      %62 = dma.done [#allocation8], 384
    $region29: #{tpu_custom_call.1} parent=1 // pred_fallthru
      _
    %s63 = sadd.s32 0, 0
    %s64 = sadd.s32 0, 0
    %s65 = smul.u32 2, %s64
    %p66 = scmp.eq.s32.totalorder 0, 0
    // Predicated region
    $region30: #{tpu_custom_call.1} parent=1 // pred_check
      %p67 = pneg %p66
    $region31: #{tpu_custom_call.1} parent=1 // pred_check_branch
      %69 = sbr.rel (%p67) target = $region33
    $region32: #{tpu_custom_call.1} parent=1 // pred_region
      %v70 = vlaneseq
      %v71 = vshrl.u32 %v70, 7
      %v72 = vlaneseq
      %v73 = vand.u32 %v72, 127
      %vm74 = vcmp.eq.s32.totalorder %v71, %v73
      %v75 = vsel %vm74, 1, 0
      %v76 = vcvt.s32.f32 %v75
      %v77 = vld [vmem:[#allocation4] sm:$0xff]
      %vm78 = vcmask 64512
      %79 = vst.msk [vmem:[#allocation2] sm:$0xff] %vm78, %v76
      %80 = vst.msk [vmem:[#allocation2 + $0x8] sm:$0xff] %vm78, %v77
      %v82 = vsel %vm78, %v77, 0
      %84 = vmatprep.subr.mxu0 0.0
      %85 = vmatpush1.msra.mxu0 0.0
      %86 = vmatprep.subr.mxu0 0.0
      %87 = vmatpush1.msra.mxu0 0.0
      %88 = vmatprep.subr.mxu0 0.0
      %89 = vmatpush1.msra.mxu0 0.0
      %90 = vmatprep.subr.mxu0 0.0
      %91 = vmatpush1.msra.mxu0 0.0
      %92 = vmatprep.subr.mxu0 0.0
      %93 = vmatpush1.msra.mxu0 0.0
      %94 = vmatprep.subr.mxu0 0.0
      %95 = vmatpush1.msra.mxu0 0.0
      %96 = vmatprep.subr.mxu0 0.0
      %97 = vmatpush1.msra.mxu0 0.0
      %98 = vmatprep.subr.mxu0 0.0
      %99 = vmatpush1.msra.mxu0 0.0
      %100 = vmatprep.subr.mxu0 0.0
      %101 = vmatpush1.msra.mxu0 0.0
      %102 = vmatprep.subr.mxu0 0.0
      %103 = vmatpush1.msra.mxu0 0.0
      %104 = vmatprep.subr.mxu0 0.0
      %105 = vmatpush1.msra.mxu0 0.0
      %106 = vmatprep.subr.mxu0 0.0
      %107 = vmatpush1.msra.mxu0 0.0
      %108 = vmatprep.subr.mxu0 0.0
      %109 = vmatpush1.msra.mxu0 0.0
      %110 = vmatprep.subr.mxu0 0.0
      %111 = vmatpush1.msra.mxu0 0.0
      %112 = vmatprep.subr.mxu0 0.0
      %113 = vmatpush1.msra.mxu0 0.0
      %114 = vmatprep.subr.mxu0 0.0
      %115 = vmatpush1.msra.mxu0 %v77
      %116 = vmatprep.subr.mxu0 0.0
      %117 = vmatpush2.msra.mxu0 0.0
      %118 = vmatprep.subr.mxu0 0.0
      %119 = vmatpush2.msra.mxu0 0.0
      %120 = vmatprep.subr.mxu0 0.0
      %121 = vmatpush2.msra.mxu0 0.0
      %122 = vmatprep.subr.mxu0 0.0
      %123 = vmatpush2.msra.mxu0 0.0
      %124 = vmatprep.subr.mxu0 0.0
      %125 = vmatpush2.msra.mxu0 0.0
      %126 = vmatprep.subr.mxu0 0.0
      %127 = vmatpush2.msra.mxu0 0.0
      %128 = vmatprep.subr.mxu0 0.0
      %129 = vmatpush2.msra.mxu0 0.0
      %130 = vmatprep.subr.mxu0 0.0
      %131 = vmatpush2.msra.mxu0 0.0
      %132 = vmatprep.subr.mxu0 0.0
      %133 = vmatpush2.msra.mxu0 0.0
      %134 = vmatprep.subr.mxu0 0.0
      %135 = vmatpush2.msra.mxu0 0.0
      %136 = vmatprep.subr.mxu0 0.0
      %137 = vmatpush2.msra.mxu0 0.0
      %138 = vmatprep.subr.mxu0 0.0
      %139 = vmatpush2.msra.mxu0 0.0
      %140 = vmatprep.subr.mxu0 0.0
      %141 = vmatpush2.msra.mxu0 0.0
      %142 = vmatprep.subr.mxu0 0.0
      %143 = vmatpush2.msra.mxu0 0.0
      %144 = vmatprep.subr.mxu0 0.0
      %145 = vmatpush2.msra.mxu0 0.0
      %146 = vmatprep.subr.mxu0 0.0
      %147 = vmatpush2.msra.mxu0 0.0
      %148 = vmatprep.mubr.f32.mxu0 0.0
      %149 = vmatmul.mubr.f32.gmra.mxu0 %v82
      %v150 = vpop.f32.mrf.mxu0
      %v151 = vadd.f32 0.0, %v150
      %v152 = vpop.f32.mrf.mxu0
      %153 = vdwg.mxu0
      %v154 = vmul.f32 %v151, 2.0
      %v155 = vsub.f32 %v154, %v76
      %156 = vst.msk [vmem:[#allocation2 + $0x10] sm:$0xff] %vm78, %v155
      %s157 = scalar_lea.vmem [#allocation4], 8
      %v158 = vld [vmem:[%s157] sm:$0xff]
      %159 = vst.msk [vmem:[#allocation2 + $0x18] sm:$0xff] %vm78, %v76
      %160 = vst.msk [vmem:[#allocation2 + $0x20] sm:$0xff] %vm78, %v158
      %v162 = vsel %vm78, %v158, 0
      %164 = vmatprep.subr.mxu0 0.0
      %165 = vmatpush1.msra.mxu0 0.0
      %166 = vmatprep.subr.mxu0 0.0
      %167 = vmatpush1.msra.mxu0 0.0
      %168 = vmatprep.subr.mxu0 0.0
      %169 = vmatpush1.msra.mxu0 0.0
      %170 = vmatprep.subr.mxu0 0.0
      %171 = vmatpush1.msra.mxu0 0.0
      %172 = vmatprep.subr.mxu0 0.0
      %173 = vmatpush1.msra.mxu0 0.0
      %174 = vmatprep.subr.mxu0 0.0
      %175 = vmatpush1.msra.mxu0 0.0
      %176 = vmatprep.subr.mxu0 0.0
      %177 = vmatpush1.msra.mxu0 0.0
      %178 = vmatprep.subr.mxu0 0.0
      %179 = vmatpush1.msra.mxu0 0.0
      %180 = vmatprep.subr.mxu0 0.0
      %181 = vmatpush1.msra.mxu0 0.0
      %182 = vmatprep.subr.mxu0 0.0
      %183 = vmatpush1.msra.mxu0 0.0
      %184 = vmatprep.subr.mxu0 0.0
      %185 = vmatpush1.msra.mxu0 0.0
      %186 = vmatprep.subr.mxu0 0.0
      %187 = vmatpush1.msra.mxu0 0.0
      %188 = vmatprep.subr.mxu0 0.0
      %189 = vmatpush1.msra.mxu0 0.0
      %190 = vmatprep.subr.mxu0 0.0
      %191 = vmatpush1.msra.mxu0 0.0
      %192 = vmatprep.subr.mxu0 0.0
      %193 = vmatpush1.msra.mxu0 0.0
      %194 = vmatprep.subr.mxu0 0.0
      %195 = vmatpush1.msra.mxu0 %v158
      %196 = vmatprep.subr.mxu0 0.0
      %197 = vmatpush2.msra.mxu0 0.0
      %198 = vmatprep.subr.mxu0 0.0
      %199 = vmatpush2.msra.mxu0 0.0
      %200 = vmatprep.subr.mxu0 0.0
      %201 = vmatpush2.msra.mxu0 0.0
      %202 = vmatprep.subr.mxu0 0.0
      %203 = vmatpush2.msra.mxu0 0.0
      %204 = vmatprep.subr.mxu0 0.0
      %205 = vmatpush2.msra.mxu0 0.0
      %206 = vmatprep.subr.mxu0 0.0
      %207 = vmatpush2.msra.mxu0 0.0
      %208 = vmatprep.subr.mxu0 0.0
      %209 = vmatpush2.msra.mxu0 0.0
      %210 = vmatprep.subr.mxu0 0.0
      %211 = vmatpush2.msra.mxu0 0.0
      %212 = vmatprep.subr.mxu0 0.0
      %213 = vmatpush2.msra.mxu0 0.0
      %214 = vmatprep.subr.mxu0 0.0
      %215 = vmatpush2.msra.mxu0 0.0
      %216 = vmatprep.subr.mxu0 0.0
      %217 = vmatpush2.msra.mxu0 0.0
      %218 = vmatprep.subr.mxu0 0.0
      %219 = vmatpush2.msra.mxu0 0.0
      %220 = vmatprep.subr.mxu0 0.0
      %221 = vmatpush2.msra.mxu0 0.0
      %222 = vmatprep.subr.mxu0 0.0
      %223 = vmatpush2.msra.mxu0 0.0
      %224 = vmatprep.subr.mxu0 0.0
      %225 = vmatpush2.msra.mxu0 0.0
      %226 = vmatprep.subr.mxu0 0.0
      %227 = vmatpush2.msra.mxu0 0.0
      %228 = vmatprep.mubr.f32.mxu0 0.0
      %229 = vmatmul.mubr.f32.gmra.mxu0 %v162
      %v230 = vpop.f32.mrf.mxu0
      %v231 = vadd.f32 0.0, %v230
      %v232 = vpop.f32.mrf.mxu0
      %233 = vdwg.mxu0
      %v234 = vmul.f32 %v231, 2.0
      %v235 = vsub.f32 %v234, %v76
      %236 = vst.msk [vmem:[#allocation2 + $0x28] sm:$0xff] %vm78, %v235
      %237 = vst.msk [vmem:[#allocation11] sm:$0xff] %vm78, %v235
    $region33: #{tpu_custom_call.1} parent=1 // pred_fallthru
      _
    %v238 = vld [vmem:[#allocation2] sm:$0xff]
    %v239 = vld [vmem:[#allocation2 + $0x8] sm:$0xff]
    %v240 = vld [vmem:[#allocation2 + $0x10] sm:$0xff]
    %v241 = vld [vmem:[#allocation2 + $0x18] sm:$0xff]
    %v242 = vld [vmem:[#allocation2 + $0x20] sm:$0xff]
    %v243 = vld [vmem:[#allocation2 + $0x28] sm:$0xff]
    %v244 = vld [vmem:[#allocation7] sm:$0xff]
    %vm245 = vcmask 64512
    %v247 = vsel %vm245, %v238, 0
    %v250 = vsel %vm245, %v239, 0
    %v253 = vsel %vm245, %v240, 0
    %v256 = vsel %vm245, %v241, 0
    %v259 = vsel %vm245, %v242, 0
    %v262 = vsel %vm245, %v243, 0
    %264 = vmatprep.subr.mxu0 0.0
    %265 = vmatpush1.msra.mxu0 0.0
    %266 = vmatprep.subr.mxu0 0.0
    %267 = vmatpush1.msra.mxu0 0.0
    %268 = vmatprep.subr.mxu0 0.0
    %269 = vmatpush1.msra.mxu0 0.0
    %270 = vmatprep.subr.mxu0 0.0
    %271 = vmatpush1.msra.mxu0 0.0
    %272 = vmatprep.subr.mxu0 0.0
    %273 = vmatpush1.msra.mxu0 0.0
    %274 = vmatprep.subr.mxu0 0.0
    %275 = vmatpush1.msra.mxu0 0.0
    %276 = vmatprep.subr.mxu0 0.0
    %277 = vmatpush1.msra.mxu0 0.0
    %278 = vmatprep.subr.mxu0 0.0
    %279 = vmatpush1.msra.mxu0 0.0
    %280 = vmatprep.subr.mxu0 0.0
    %281 = vmatpush1.msra.mxu0 0.0
    %282 = vmatprep.subr.mxu0 0.0
    %283 = vmatpush1.msra.mxu0 0.0
    %284 = vmatprep.subr.mxu0 0.0
    %285 = vmatpush1.msra.mxu0 0.0
    %286 = vmatprep.subr.mxu0 0.0
    %287 = vmatpush1.msra.mxu0 0.0
    %288 = vmatprep.subr.mxu0 0.0
    %289 = vmatpush1.msra.mxu0 0.0
    %290 = vmatprep.subr.mxu0 0.0
    %291 = vmatpush1.msra.mxu0 0.0
    %292 = vmatprep.subr.mxu0 0.0
    %293 = vmatpush1.msra.mxu0 0.0
    %294 = vmatprep.subr.mxu0 0.0
    %295 = vmatpush1.msra.mxu0 %v244
    %296 = vmatprep.subr.mxu0 0.0
    %297 = vmatpush2.msra.mxu0 0.0
    %298 = vmatprep.subr.mxu0 0.0
    %299 = vmatpush2.msra.mxu0 0.0
    %300 = vmatprep.subr.mxu0 0.0
    %301 = vmatpush2.msra.mxu0 0.0
    %302 = vmatprep.subr.mxu0 0.0
    %303 = vmatpush2.msra.mxu0 0.0
    %304 = vmatprep.subr.mxu0 0.0
    %305 = vmatpush2.msra.mxu0 0.0
    %306 = vmatprep.subr.mxu0 0.0
    %307 = vmatpush2.msra.mxu0 0.0
    %308 = vmatprep.subr.mxu0 0.0
    %309 = vmatpush2.msra.mxu0 0.0
    %310 = vmatprep.subr.mxu0 0.0
    %311 = vmatpush2.msra.mxu0 0.0
    %312 = vmatprep.subr.mxu0 0.0
    %313 = vmatpush2.msra.mxu0 0.0
    %314 = vmatprep.subr.mxu0 0.0
    %315 = vmatpush2.msra.mxu0 0.0
    %316 = vmatprep.subr.mxu0 0.0
    %317 = vmatpush2.msra.mxu0 0.0
    %318 = vmatprep.subr.mxu0 0.0
    %319 = vmatpush2.msra.mxu0 0.0
    %320 = vmatprep.subr.mxu0 0.0
    %321 = vmatpush2.msra.mxu0 0.0
    %322 = vmatprep.subr.mxu0 0.0
    %323 = vmatpush2.msra.mxu0 0.0
    %324 = vmatprep.subr.mxu0 0.0
    %325 = vmatpush2.msra.mxu0 0.0
    %326 = vmatprep.subr.mxu0 0.0
    %327 = vmatpush2.msra.mxu0 0.0
    %328 = vmatprep.mubr.f32.mxu0 0.0
    %329 = vmatmul.mubr.f32.gmra.mxu0 %v247
    %v330 = vpop.f32.mrf.mxu0
    %v331 = vadd.f32 0.0, %v330
    %v332 = vpop.f32.mrf.mxu0
    %333 = vmatprep.mubr.f32.mxu0 0.0
    %334 = vmatmul.mubr.f32.gmra.mxu0 %v250
    %v335 = vpop.f32.mrf.mxu0
    %v336 = vadd.f32 0.0, %v335
    %v337 = vpop.f32.mrf.mxu0
    %338 = vmatprep.mubr.f32.mxu0 0.0
    %339 = vmatmul.mubr.f32.gmra.mxu0 %v253
    %v340 = vpop.f32.mrf.mxu0
    %v341 = vadd.f32 0.0, %v340
    %v342 = vpop.f32.mrf.mxu0
    %343 = vmatprep.mubr.f32.mxu0 0.0
    %344 = vmatmul.mubr.f32.gmra.mxu0 %v256
    %v345 = vpop.f32.mrf.mxu0
    %v346 = vadd.f32 0.0, %v345
    %v347 = vpop.f32.mrf.mxu0
    %348 = vmatprep.mubr.f32.mxu0 0.0
    %349 = vmatmul.mubr.f32.gmra.mxu0 %v259
    %v350 = vpop.f32.mrf.mxu0
    %v351 = vadd.f32 0.0, %v350
    %v352 = vpop.f32.mrf.mxu0
    %353 = vmatprep.mubr.f32.mxu0 0.0
    %354 = vmatmul.mubr.f32.gmra.mxu0 %v262
    %v355 = vpop.f32.mrf.mxu0
    %v356 = vadd.f32 0.0, %v355
    %v357 = vpop.f32.mrf.mxu0
    %358 = vdwg.mxu0
    %359 = vst.msk [vmem:[#allocation3] sm:$0xff] %vm245, %v331
    %360 = vst.msk [vmem:[#allocation3 + $0x8] sm:$0xff] %vm245, %v336
    %361 = vst.msk [vmem:[#allocation3 + $0x10] sm:$0xff] %vm245, %v341
    %362 = vst.msk [vmem:[#allocation3 + $0x18] sm:$0xff] %vm245, %v346
    %363 = vst.msk [vmem:[#allocation3 + $0x20] sm:$0xff] %vm245, %v351
    %364 = vst.msk [vmem:[#allocation3 + $0x28] sm:$0xff] %vm245, %v356
    %v365 = vld [vmem:[%s3] sm:$0x1]
    %v366 = vld [vmem:[#allocation3] sm:$0xff]
    %v367 = vld [vmem:[#allocation3 + $0x8] sm:$0xff]
    %v368 = vld [vmem:[#allocation3 + $0x10] sm:$0xff]
    %v369 = vld [vmem:[#allocation3 + $0x18] sm:$0xff]
    %v370 = vld [vmem:[#allocation3 + $0x20] sm:$0xff]
    %v371 = vld [vmem:[#allocation3 + $0x28] sm:$0xff]
    %373 = vrot.lane.b32.xlu0 %v367, 4
    %v374 = vpop.permute.xlu0 %373
    %377 = vrot.lane.b32.xlu0 %v368, 8
    %v378 = vpop.permute.xlu0 %377
    %381 = vrot.lane.b32.xlu0 %v369, 12
    %v382 = vpop.permute.xlu0 %381
    %385 = vrot.lane.b32.xlu0 %v370, 16
    %v386 = vpop.permute.xlu0 %385
    %389 = vrot.lane.b32.xlu0 %v371, 20
    %v390 = vpop.permute.xlu0 %389
    %vm392 = vcmask 31744
    %v393 = vsel %vm392, %v366, %v374
    %v394 = vsel %vm245, %v393, %v378
    %vm395 = vcmask 97280
    %v396 = vsel %vm395, %v394, %v382
    %vm397 = vcmask 130048
    %v398 = vsel %vm397, %v396, %v386
    %vm399 = vcmask 162816
    %v400 = vsel %vm399, %v398, %v390
    %v401 = vld [vmem:[#allocation9] sm:$0xff]
    %v402 = vld [vmem:[#allocation9 + $0x8] sm:$0xff]
    %v403 = vld [vmem:[#allocation9 + $0x10] sm:$0xff]
    %v405 = vlaneseq
    %v406 = vshrl.u32 %v405, 7
    %v407 = vsub.s32 0, %v406
    %v408 = vrot.slane %v365, %v407
    %vm410 = vcmask 195584
    %v412 = vsel %vm410, %v400, 0
    %414 = vmatprep.subr.mxu0 0.0
    %415 = vmatpush1.msra.mxu0 0.0
    %416 = vmatprep.subr.mxu0 0.0
    %417 = vmatpush1.msra.mxu0 0.0
    %418 = vmatprep.subr.mxu0 0.0
    %419 = vmatpush1.msra.mxu0 0.0
    %420 = vmatprep.subr.mxu0 0.0
    %421 = vmatpush1.msra.mxu0 0.0
    %422 = vmatprep.subr.mxu0 0.0
    %423 = vmatpush1.msra.mxu0 0.0
    %424 = vmatprep.subr.mxu0 0.0
    %425 = vmatpush1.msra.mxu0 0.0
    %426 = vmatprep.subr.mxu0 0.0
    %427 = vmatpush1.msra.mxu0 0.0
    %428 = vmatprep.subr.mxu0 0.0
    %429 = vmatpush1.msra.mxu0 0.0
    %430 = vmatprep.subr.mxu0 0.0
    %431 = vmatpush1.msra.mxu0 0.0
    %432 = vmatprep.subr.mxu0 0.0
    %433 = vmatpush1.msra.mxu0 0.0
    %434 = vmatprep.subr.mxu0 0.0
    %435 = vmatpush1.msra.mxu0 0.0
    %436 = vmatprep.subr.mxu0 0.0
    %437 = vmatpush1.msra.mxu0 0.0
    %438 = vmatprep.subr.mxu0 0.0
    %439 = vmatpush1.msra.mxu0 0.0
    %440 = vmatprep.subr.mxu0 0.0
    %441 = vmatpush1.msra.mxu0 %v403
    %442 = vmatprep.subr.mxu0 0.0
    %443 = vmatpush1.msra.mxu0 %v402
    %444 = vmatprep.subr.mxu0 0.0
    %445 = vmatpush1.msra.mxu0 %v401
    %446 = vmatprep.subr.mxu0 0.0
    %447 = vmatpush2.msra.mxu0 0.0
    %448 = vmatprep.subr.mxu0 0.0
    %449 = vmatpush2.msra.mxu0 0.0
    %450 = vmatprep.subr.mxu0 0.0
    %451 = vmatpush2.msra.mxu0 0.0
    %452 = vmatprep.subr.mxu0 0.0
    %453 = vmatpush2.msra.mxu0 0.0
    %454 = vmatprep.subr.mxu0 0.0
    %455 = vmatpush2.msra.mxu0 0.0
    %456 = vmatprep.subr.mxu0 0.0
    %457 = vmatpush2.msra.mxu0 0.0
    %458 = vmatprep.subr.mxu0 0.0
    %459 = vmatpush2.msra.mxu0 0.0
    %460 = vmatprep.subr.mxu0 0.0
    %461 = vmatpush2.msra.mxu0 0.0
    %462 = vmatprep.subr.mxu0 0.0
    %463 = vmatpush2.msra.mxu0 0.0
    %464 = vmatprep.subr.mxu0 0.0
    %465 = vmatpush2.msra.mxu0 0.0
    %466 = vmatprep.subr.mxu0 0.0
    %467 = vmatpush2.msra.mxu0 0.0
    %468 = vmatprep.subr.mxu0 0.0
    %469 = vmatpush2.msra.mxu0 0.0
    %470 = vmatprep.subr.mxu0 0.0
    %471 = vmatpush2.msra.mxu0 0.0
    %472 = vmatprep.subr.mxu0 0.0
    %473 = vmatpush2.msra.mxu0 0.0
    %474 = vmatprep.subr.mxu0 0.0
    %475 = vmatpush2.msra.mxu0 0.0
    %476 = vmatprep.subr.mxu0 0.0
    %477 = vmatpush2.msra.mxu0 0.0
    %478 = vmatprep.mubr.f32.mxu0 0.0
    %479 = vmatmul.mubr.f32.gmra.mxu0 %v412
    %v480 = vpop.f32.mrf.mxu0
    %v481 = vadd.f32 %v408, %v480
    %v482 = vpop.f32.mrf.mxu0
    %483 = vdwg.mxu0
    %484 = vst [vmem:[#allocation10] sm:$0xff] %v481
    %v485 = vld [vmem:[#allocation3] sm:$0xff]
    %v486 = vld [vmem:[#allocation3 + $0x8] sm:$0xff]
    %v487 = vld [vmem:[#allocation3 + $0x10] sm:$0xff]
    %v488 = vld [vmem:[#allocation3 + $0x18] sm:$0xff]
    %v489 = vld [vmem:[#allocation3 + $0x20] sm:$0xff]
    %v490 = vld [vmem:[#allocation3 + $0x28] sm:$0xff]
    %492 = vrot.lane.b32.xlu0 %v485, 124
    %v493 = vpop.permute.xlu0 %492
    %496 = vrot.lane.b32.xlu0 %v487, 4
    %v497 = vpop.permute.xlu0 %496
    %500 = vrot.lane.b32.xlu0 %v488, 8
    %v501 = vpop.permute.xlu0 %500
    %504 = vrot.lane.b32.xlu0 %v489, 12
    %v505 = vpop.permute.xlu0 %504
    %508 = vrot.lane.b32.xlu0 %v490, 16
    %v509 = vpop.permute.xlu0 %508
    %v511 = vsel %vm392, %v493, %v486
    %v512 = vsel %vm245, %v511, %v497
    %v513 = vsel %vm395, %v512, %v501
    %v514 = vsel %vm397, %v513, %v505
    %v515 = vsel %vm399, %v514, %v509
    %v516 = vld [vmem:[#allocation9] sm:$0xff]
    %v517 = vld [vmem:[#allocation9 + $0x8] sm:$0xff]
    %v518 = vld [vmem:[#allocation9 + $0x10] sm:$0xff]
    %v520 = vsel %vm410, %v515, 0
    %522 = vmatprep.subr.mxu0 0.0
    %523 = vmatpush1.msra.mxu0 0.0
    %524 = vmatprep.subr.mxu0 0.0
    %525 = vmatpush1.msra.mxu0 0.0
    %526 = vmatprep.subr.mxu0 0.0
    %527 = vmatpush1.msra.mxu0 0.0
    %528 = vmatprep.subr.mxu0 0.0
    %529 = vmatpush1.msra.mxu0 0.0
    %530 = vmatprep.subr.mxu0 0.0
    %531 = vmatpush1.msra.mxu0 0.0
    %532 = vmatprep.subr.mxu0 0.0
    %533 = vmatpush1.msra.mxu0 0.0
    %534 = vmatprep.subr.mxu0 0.0
    %535 = vmatpush1.msra.mxu0 0.0
    %536 = vmatprep.subr.mxu0 0.0
    %537 = vmatpush1.msra.mxu0 0.0
    %538 = vmatprep.subr.mxu0 0.0
    %539 = vmatpush1.msra.mxu0 0.0
    %540 = vmatprep.subr.mxu0 0.0
    %541 = vmatpush1.msra.mxu0 0.0
    %542 = vmatprep.subr.mxu0 0.0
    %543 = vmatpush1.msra.mxu0 0.0
    %544 = vmatprep.subr.mxu0 0.0
    %545 = vmatpush1.msra.mxu0 0.0
    %546 = vmatprep.subr.mxu0 0.0
    %547 = vmatpush1.msra.mxu0 0.0
    %548 = vmatprep.subr.mxu0 0.0
    %549 = vmatpush1.msra.mxu0 %v518
    %550 = vmatprep.subr.mxu0 0.0
    %551 = vmatpush1.msra.mxu0 %v517
    %552 = vmatprep.subr.mxu0 0.0
    %553 = vmatpush1.msra.mxu0 %v516
    %554 = vmatprep.subr.mxu0 0.0
    %555 = vmatpush2.msra.mxu0 0.0
    %556 = vmatprep.subr.mxu0 0.0
    %557 = vmatpush2.msra.mxu0 0.0
    %558 = vmatprep.subr.mxu0 0.0
    %559 = vmatpush2.msra.mxu0 0.0
    %560 = vmatprep.subr.mxu0 0.0
    %561 = vmatpush2.msra.mxu0 0.0
    %562 = vmatprep.subr.mxu0 0.0
    %563 = vmatpush2.msra.mxu0 0.0
    %564 = vmatprep.subr.mxu0 0.0
    %565 = vmatpush2.msra.mxu0 0.0
    %566 = vmatprep.subr.mxu0 0.0
    %567 = vmatpush2.msra.mxu0 0.0
    %568 = vmatprep.subr.mxu0 0.0
    %569 = vmatpush2.msra.mxu0 0.0
    %570 = vmatprep.subr.mxu0 0.0
    %571 = vmatpush2.msra.mxu0 0.0
    %572 = vmatprep.subr.mxu0 0.0
    %573 = vmatpush2.msra.mxu0 0.0
    %574 = vmatprep.subr.mxu0 0.0
    %575 = vmatpush2.msra.mxu0 0.0
    %576 = vmatprep.subr.mxu0 0.0
    %577 = vmatpush2.msra.mxu0 0.0
    %578 = vmatprep.subr.mxu0 0.0
    %579 = vmatpush2.msra.mxu0 0.0
    %580 = vmatprep.subr.mxu0 0.0
    %581 = vmatpush2.msra.mxu0 0.0
    %582 = vmatprep.subr.mxu0 0.0
    %583 = vmatpush2.msra.mxu0 0.0
    %584 = vmatprep.subr.mxu0 0.0
    %585 = vmatpush2.msra.mxu0 0.0
    %586 = vmatprep.mubr.f32.mxu0 0.0
    %587 = vmatmul.mubr.f32.gmra.mxu0 %v520
    %v588 = vpop.f32.mrf.mxu0
    %v589 = vadd.f32 %v408, %v588
    %v590 = vpop.f32.mrf.mxu0
    %591 = vdwg.mxu0
    %s592 = scalar_lea.vmem [#allocation10], 8
    %593 = vst [vmem:[%s592] sm:$0xff] %v589
    // Predicated region
    $region34: #{tpu_custom_call.1} parent=1 // pred_check
      _
    $region35: #{tpu_custom_call.1} parent=1 // pred_check_branch
      %595 = sbr.rel (0) target = $region37
    $region36: #{tpu_custom_call.1} parent=1 // pred_region
      %s596 = sadd.s32 0, 0
      %s597 = smul.u32 2, %s596
      %s599 = ssub.s32 256, 256
      %600 = vsyncadd [#allocation6], %s599
      %s601 = smul.addr %s597, 128
      %s602 = scalar_lea.hbm %s4, %s601
      %s603 = sshll.u32 [#allocation10], 4
      %s604 = int_to_ptr.vmem [resolvable:$true] %s603
      %609 = dma.vmem_to_hbm [thread:$0]  %s604, 256, %s602, [#allocation6], 128, 128, 8
    $region37: #{tpu_custom_call.1} parent=1 // pred_fallthru
      _
    // Predicated region
    $region38: #{tpu_custom_call.1} parent=1 // pred_check
      _
    $region39: #{tpu_custom_call.1} parent=1 // pred_check_branch
      %611 = sbr.rel (0) target = $region41
    $region40: #{tpu_custom_call.1} parent=1 // pred_region
      %s613 = ssub.s32 128, 128
      %614 = vsyncadd [#allocation12], %s613
      %s616 = sshll.u32 [#allocation11], 4
      %s617 = int_to_ptr.vmem [resolvable:$true] %s616
      %619 = dma.vmem_to_hbm [thread:$0]  %s617, 128, %s5, [#allocation12]
    $region41: #{tpu_custom_call.1} parent=1 // pred_fallthru
      _
    // Predicated region
    $region42: #{tpu_custom_call.1} parent=1 // pred_check
      _
    $region43: #{tpu_custom_call.1} parent=1 // pred_check_branch
      %621 = sbr.rel (0) target = $region45
    $region44: #{tpu_custom_call.1} parent=1 // pred_region
      %622 = dma.done [#allocation6], 256
    $region45: #{tpu_custom_call.1} parent=1 // pred_fallthru
      _
    // Predicated region
    $region46: #{tpu_custom_call.1} parent=1 // pred_check
      _
    $region47: #{tpu_custom_call.1} parent=1 // pred_check_branch
      %624 = sbr.rel (0) target = $region49
    $region48: #{tpu_custom_call.1} parent=1 // pred_region
      %625 = dma.done [#allocation12], 128
    $region49: #{tpu_custom_call.1} parent=1 // pred_fallthru
      _
    %626 = vsyncpa [#allocation5], 1
    %627 = vsyncpa [#allocation8], 1
    %628 = vsyncpa [#allocation6], 1
    %629 = vsyncpa [#allocation12], 1

</llo_original>
